<compile_context>
chip_gen: v5e
topology: v5e:2x2
jax: 0.10.0
libtpu: 0.0.40
codegen_flags: <defaults>
</compile_context>

<pallas_src>
import jax
import jax.numpy as jnp
from jax.experimental import pallas as pl
from jax.experimental.pallas import tpu as pltpu


def _round_up(x, m):
    return (x + m - 1) // m * m


def _default_tiles():
    """Per-generation default (tile_d, tile_n)."""
    try:
        kind = jax.devices()[0].device_kind.lower()
    except Exception:  # pragma: no cover - defensive
        kind = ""
    if "v6" in kind or "v7" in kind:
        return 1024, 2048   # 8 MiB f32 X block; 16 MiB double-buffered < 32 MiB scoped default
    return 512, 2048        # 4 MiB f32 X block; safe under v5e's 16 MiB scoped default


def _make_ridge_kernel(d_total, tile_d, mxu_dtype):
    d_rem = d_total % tile_d

    def kernel(x_ref, tht_ref, o_ref, acc_ref):
        # x_ref:   (tile_d, tile_n)  -- X tile in natural (D, N) layout
        # tht_ref: (K, tile_d)       -- theta.T tile (pre-transposed in wrapper)
        # o_ref:   (K, tile_n)       -- lane-dense output tile
        # acc_ref: (K, tile_n) f32   -- accumulator, VMEM-resident over the D axis
        k = pl.program_id(1)

        @pl.when(k == 0)
        def _():
            acc_ref[...] = jnp.zeros_like(acc_ref)

        x = x_ref[...]
        if d_rem != 0:
            # Ragged final D tile: the Pallas-padded tail rows of a partial
            # block hold undefined data -> zero them so they are inert in the
            # reduction.  (theta.T is zero-padded in the wrapper, so the tail
            # product is exactly 0.)
            row = jax.lax.broadcasted_iota(jnp.int32, x.shape, 0)
            x = jnp.where(k * tile_d + row < d_total, x, jnp.zeros_like(x))

        tht = tht_ref[...]
        if mxu_dtype is not None:
            # bf16 operands keep the K-narrow MXU well above HBM streaming
            # rate; accumulation stays float32.
            x = x.astype(mxu_dtype)
            tht = tht.astype(mxu_dtype)

        # theta.T @ X : contract over D (lhs dim 1, rhs dim 0) -> (K, tile_n).
        acc_ref[...] += jax.lax.dot_general(
            tht, x,
            dimension_numbers=(((1,), (0,)), ((), ())),
            preferred_element_type=jnp.float32,
        )

        @pl.when(k == pl.num_programs(1) - 1)
        def _():
            o_ref[...] = acc_ref[...].astype(o_ref.dtype)

    return kernel


def ridge_forward(X, theta, *, tile_n=None, tile_d=None, mxu_dtype=jnp.bfloat16):
    """Computes X.T @ theta with a tiled, pipelined Pallas TPU kernel.

    X: (D, N), theta: (D, K)  ->  (N, K)

    mxu_dtype: dtype the operand tiles are cast to *inside the kernel* for the
      MXU (default bfloat16; accumulation is always float32).  Pass None for
      exact float32 matmul semantics.
    """
    D, N = X.shape
    D2, K = theta.shape
    assert D == D2, "feature dims must match"
    out_dtype = X.dtype

    if tile_d is None or tile_n is None:
        dflt_d, dflt_n = _default_tiles()
        tile_d = dflt_d if tile_d is None else tile_d
        tile_n = dflt_n if tile_n is None else tile_n

    # Tile-size sanitization: multiples of (16, 128) (16 so bf16 tiles pack
    # cleanly along sublanes), clamped to the (rounded) true dims so small
    # problems don't waste DMA/MXU work.
    tile_d = max(16, _round_up(tile_d, 16))
    tile_d = min(tile_d, _round_up(D, 16))
    if tile_d < D:
        # More than one D block: theta.T's lane-dim block must be a 128-multiple.
        tile_d = _round_up(tile_d, 128)

    tile_n = max(128, _round_up(tile_n, 128))
    tile_n = min(tile_n, _round_up(N, 128))
    # Guarantee >= 2 tiles on the parallel N axis when possible so a megacore
    # part (v7x) can split work across both TensorCores.
    if N > 128 and pl.cdiv(N, tile_n) < 2:
        tile_n = _round_up(pl.cdiv(N, 2), 128)

    n_d = pl.cdiv(D, tile_d)   # reduction tiles
    n_n = pl.cdiv(N, tile_n)   # parallel tiles
    d_pad = n_d * tile_d

    # theta is tiny: pre-transpose to (K, D) (avoids a per-step transpose in
    # the kernel) and zero-pad the ragged D tail.  X is NOT padded or copied.
    theta_t = theta.T
    if d_pad != D:
        theta_t = jnp.pad(theta_t, ((0, 0), (0, d_pad - D)))

    kernel = _make_ridge_kernel(D, tile_d, mxu_dtype)
    in_bytes = X.dtype.itemsize
    out_bytes = jnp.dtype(out_dtype).itemsize

    out_kn = pl.pallas_call(
        kernel,
        out_shape=jax.ShapeDtypeStruct((K, N), out_dtype),
        grid_spec=pltpu.PrefetchScalarGridSpec(
            num_scalar_prefetch=0,
            grid=(n_n, n_d),
            in_specs=[
                # X block: (tile_d, tile_n), advances over D (k) and N (i).
                pl.BlockSpec((tile_d, tile_n), lambda i, k: (k, i)),
                # theta.T block: (K, tile_d), advances over D only.
                pl.BlockSpec((K, tile_d), lambda i, k: (0, k)),
            ],
            # Output block constant across the D axis -> VMEM-resident accumulator.
            out_specs=pl.BlockSpec((K, tile_n), lambda i, k: (0, i)),
            scratch_shapes=[pltpu.VMEM((K, tile_n), jnp.float32)],
        ),
        compiler_params=pltpu.CompilerParams(
            dimension_semantics=("parallel", "arbitrary"),
        ),
        cost_estimate=pl.CostEstimate(
            flops=2 * D * N * K,
            bytes_accessed=in_bytes * (D * N + D * K) + out_bytes * (K * N),
            transcendentals=0,
        ),
    )(X, theta_t)

    # (K, N) -> (N, K): tiny transpose in the wrapper.
    return out_kn.T


if __name__ == "__main__":
    key = jax.random.PRNGKey(0)
    kx, kt = jax.random.split(key)

    # ---- Case 1: small aligned shapes (D=32 features, N=128 samples, K=8) ----
    D, N, K = 32, 128, 8
    X = jax.random.normal(kx, (D, N), dtype=jnp.float32)
    theta = jax.random.normal(kt, (D, K), dtype=jnp.float32)
    lambda_ = 0.1  # regularization only affects loss(), not forward

    y_ref = X.T @ theta  # plain JAX reference

    # Exact f32 MXU path.
    y32 = ridge_forward(X, theta, mxu_dtype=None)
    jax.block_until_ready(y32)
    assert y32.shape == (N, K)
    assert jnp.allclose(y32, y_ref, atol=1e-4, rtol=1e-4)

    # Default path: bf16 MXU operands, f32 accumulation (bf16-mantissa-level error).
    y16 = ridge_forward(X, theta)
    jax.block_until_ready(y16)
    assert y16.shape == (N, K)
    assert jnp.allclose(y16, y_ref, atol=5e-2, rtol=5e-2)

    # ---- Case 2: ragged D and N, multiple reduction + parallel tiles ----
    # Exercises the in-kernel tail-row mask, accumulation over D tiles, and
    # partial output writeback (no padding of X anywhere).
    D2, N2, K2 = 300, 200, 8
    X2 = jax.random.normal(kx, (D2, N2), dtype=jnp.float32)
    theta2 = jax.random.normal(kt, (D2, K2), dtype=jnp.float32)
    y2_ref = X2.T @ theta2

    y2_f32 = ridge_forward(X2, theta2, tile_d=128, tile_n=128, mxu_dtype=None)
    jax.block_until_ready(y2_f32)
    assert y2_f32.shape == (N2, K2)
    assert jnp.allclose(y2_f32, y2_ref, atol=1e-3, rtol=1e-3)

    y2_bf16 = ridge_forward(X2, theta2, tile_d=128, tile_n=128)
    jax.block_until_ready(y2_bf16)
    assert jnp.allclose(y2_bf16, y2_ref, atol=5e-1, rtol=5e-2)

    print("KERNEL_OK")
</pallas_src>

<mosaic_0001>
module attributes {stable_mosaic.version = 11 : i64} {
  func.func @kernel(%arg0: i32, %arg1: i32, %arg2: memref<32x128xf32, #tpu.memory_space<vmem>>, %arg3: memref<8x32xf32, #tpu.memory_space<vmem>>, %arg4: memref<8x128xf32, #tpu.memory_space<vmem>>, %arg5: memref<8x128xf32, #tpu.memory_space<vmem>>) attributes {dimension_semantics = [#tpu.dimension_semantics<parallel>, #tpu.dimension_semantics<arbitrary>], iteration_bounds = array<i64: 1, 1>, scalar_prefetch = 0 : i64, scratch_operands = 1 : i64, tpu.core_type = #tpu.core_type<tc>, window_params = [{transform_indices = @transform_0, window_bounds = array<i64: 32, 128>}, {transform_indices = @transform_1, window_bounds = array<i64: 8, 32>}, {transform_indices = @transform_2, window_bounds = array<i64: 8, 128>}]} {
    %c0_i32 = arith.constant 0 : i32
    %0 = arith.cmpi eq, %arg1, %c0_i32 : i32
    %1 = arith.extui %0 : i1 to i32
    %c0_i32_0 = arith.constant 0 : i32
    %2 = arith.cmpi ne, %1, %c0_i32_0 : i32
    scf.if %2 {
      %cst_10 = arith.constant 0.000000e+00 : f32
      %12 = vector.broadcast %cst_10 : f32 to vector<8x128xf32>
      %c0_11 = arith.constant 0 : index
      %c0_12 = arith.constant 0 : index
      %13 = vector.load %arg5[%c0_11, %c0_12] : memref<8x128xf32, #tpu.memory_space<vmem>>, vector<8x128xf32>
      tpu.vector_store %arg5[%c0_11, %c0_12], %12 {strides = array<i32>} : memref<8x128xf32, #tpu.memory_space<vmem>>, vector<8x128xf32>,
    } else {
    }
    %c0 = arith.constant 0 : index
    %c0_1 = arith.constant 0 : index
    %3 = vector.load %arg2[%c0, %c0_1] : memref<32x128xf32, #tpu.memory_space<vmem>>, vector<32x128xf32>
    %c0_2 = arith.constant 0 : index
    %c0_3 = arith.constant 0 : index
    %4 = vector.load %arg3[%c0_2, %c0_3] : memref<8x32xf32, #tpu.memory_space<vmem>>, vector<8x32xf32>
    %c0_4 = arith.constant 0 : index
    %c0_5 = arith.constant 0 : index
    %5 = vector.load %arg5[%c0_4, %c0_5] : memref<8x128xf32, #tpu.memory_space<vmem>>, vector<8x128xf32>
    %cst = arith.constant dense<0.000000e+00> : vector<8x128xf32>
    %6 = tpu.matmul %4, %3, %cst {dimension_numbers = #tpu.dot_dimension_numbers<[1], [0], [0], [1], [0, 0, 1, 1], [], []>} : vector<8x32xf32>, vector<32x128xf32>, vector<8x128xf32> -> vector<8x128xf32>
    %7 = arith.addf %5, %6 : vector<8x128xf32>
    %c0_6 = arith.constant 0 : index
    %c0_7 = arith.constant 0 : index
    %8 = vector.load %arg5[%c0_6, %c0_7] : memref<8x128xf32, #tpu.memory_space<vmem>>, vector<8x128xf32>
    tpu.vector_store %arg5[%c0_6, %c0_7], %7 {strides = array<i32>} : memref<8x128xf32, #tpu.memory_space<vmem>>, vector<8x128xf32>,
    %c0_i32_8 = arith.constant 0 : i32
    %9 = arith.cmpi eq, %arg1, %c0_i32_8 : i32
    %10 = arith.extui %9 : i1 to i32
    %c0_i32_9 = arith.constant 0 : i32
    %11 = arith.cmpi ne, %10, %c0_i32_9 : i32
    scf.if %11 {
      %c0_10 = arith.constant 0 : index
      %c0_11 = arith.constant 0 : index
      %12 = vector.load %arg5[%c0_10, %c0_11] : memref<8x128xf32, #tpu.memory_space<vmem>>, vector<8x128xf32>
      %c0_12 = arith.constant 0 : index
      %c0_13 = arith.constant 0 : index
      %13 = vector.load %arg4[%c0_12, %c0_13] : memref<8x128xf32, #tpu.memory_space<vmem>>, vector<8x128xf32>
      tpu.vector_store %arg4[%c0_12, %c0_13], %12 {strides = array<i32>} : memref<8x128xf32, #tpu.memory_space<vmem>>, vector<8x128xf32>,
    } else {
    }
    return
  }
  func.func @transform_0(%arg0: i32, %arg1: i32) -> (i32, i32) {
    %c0_i32 = arith.constant 0 : i32
    return %arg1, %arg0 : i32, i32
  }
  func.func @transform_1(%arg0: i32, %arg1: i32) -> (i32, i32) {
    %c0_i32 = arith.constant 0 : i32
    %c0_i32_0 = arith.constant 0 : i32
    return %c0_i32, %arg1 : i32, i32
  }
  func.func @transform_2(%arg0: i32, %arg1: i32) -> (i32, i32) {
    %c0_i32 = arith.constant 0 : i32
    %c0_i32_0 = arith.constant 0 : i32
    return %c0_i32, %arg0 : i32, i32
  }
}

</mosaic_0001>

<llo_original>
// kernel: tpu_custom_call.1
$region0: #{tpu_custom_call.1}
  #allocation0 [shape = 'u32[]', space=smem, size = 0x4, offset = 0x4, fixed_abs, tag = 'smem constant byte address 0x4 - core index']
  #allocation1 [shape = 'u32[72,128]{1,0:T(1,128)}', space=vmem, size = 0x9000, scoped, tag = 'internal scratch']
  #allocation2 [shape = 'f32[8,128]{1,0:T(8,128)}', space=vmem, size = 0x1000, scoped, tag = 'scratch operand']
  %s0 = inlined_call_operand.hbm [shape: f32[32,128], index: 0, kind: input, shape index: {}]
  %s1 = inlined_call_operand.hbm [shape: f32[8,32], index: 1, kind: input, shape index: {}]
  %s2 = inlined_call_operand.hbm [shape: f32[8,128], index: 2, kind: output, shape index: {}]
  %s3 = sld [smem:[#allocation0]]
  $region34: #{tpu_custom_call.1} parent=0
    _
  %s5 = ssub.s32 1, %s3
  %s6 = scalar_select 0, %s5, %s3
  $region1: #{tpu_custom_call.1} parent=0
    #allocation3 [shape = 'u8[16384]{0}', space=vmem, size = 0x4000, scoped, tag = 'input window, operand 0, single buffered']
    #allocation4 [shape = 's32[1]{0}', space=sflag, size = 0x4, scoped, tag = 'scoped memory for tpu_custom_call.1']
    #allocation5 [shape = 's32[1]{0}', space=sflag, size = 0x4, scoped, tag = 'scoped memory for tpu_custom_call.1']
    #allocation6 [shape = 'u8[4096]{0}', space=vmem, size = 0x1000, scoped, tag = 'input window, operand 1, single buffered']
    #allocation7 [shape = 's32[1]{0}', space=sflag, size = 0x4, scoped, tag = 'scoped memory for tpu_custom_call.1']
    #allocation8 [shape = 'u8[4096]{0}', space=vmem, size = 0x1000, scoped, tag = 'output window, operand 0, single buffered']
    %7 = vsyncpa [#allocation4], 0
    %8 = vsyncpa [#allocation7], 0
    %9 = vsyncpa [#allocation5], 0
    // Predicated region
    $region2: #{tpu_custom_call.1} parent=1 // pred_check
      _
    $region3: #{tpu_custom_call.1} parent=1 // pred_check_branch
      %11 = sbr.rel (0) target = $region5
    $region4: #{tpu_custom_call.1} parent=1 // pred_region
      %13 = vsyncadd [#allocation4], 0
      %s14 = sshll.u32 %s0, 4
      %s15 = int_to_ptr.hbm [resolvable:$true] %s14
      %s16 = sshll.u32 [#allocation3], 4
      %s17 = int_to_ptr.vmem [resolvable:$true] %s16
      %22 = dma.hbm_to_vmem [thread:$0]  %s15, 512, %s17, [#allocation4], 128, 128, 8
    $region5: #{tpu_custom_call.1} parent=1 // pred_fallthru
      _
    // Predicated region
    $region6: #{tpu_custom_call.1} parent=1 // pred_check
      _
    $region7: #{tpu_custom_call.1} parent=1 // pred_check_branch
      %24 = sbr.rel (0) target = $region9
    $region8: #{tpu_custom_call.1} parent=1 // pred_region
      %26 = vsyncadd [#allocation7], 0
      %s28 = sshll.u32 %s1, 4
      %s29 = int_to_ptr.hbm [resolvable:$true] %s28
      %s30 = sshll.u32 [#allocation6], 4
      %s31 = int_to_ptr.vmem [resolvable:$true] %s30
      %33 = dma.hbm_to_vmem [thread:$0]  %s29, 128, %s31, [#allocation7]
    $region9: #{tpu_custom_call.1} parent=1 // pred_fallthru
      _
    // Predicated region
    $region10: #{tpu_custom_call.1} parent=1 // pred_check
      _
    $region11: #{tpu_custom_call.1} parent=1 // pred_check_branch
      %35 = sbr.rel (0) target = $region13
    $region12: #{tpu_custom_call.1} parent=1 // pred_region
      %37 = dma.done [#allocation4], 512
    $region13: #{tpu_custom_call.1} parent=1 // pred_fallthru
      _
    // Predicated region
    $region14: #{tpu_custom_call.1} parent=1 // pred_check
      _
    $region15: #{tpu_custom_call.1} parent=1 // pred_check_branch
      %39 = sbr.rel (0) target = $region17
    $region16: #{tpu_custom_call.1} parent=1 // pred_region
      %41 = dma.done [#allocation7], 128
    $region17: #{tpu_custom_call.1} parent=1 // pred_fallthru
      _
    %p42 = scmp.eq.s32.totalorder 0, 0
    // Predicated region
    $region18: #{tpu_custom_call.1} parent=1 // pred_check
      %p43 = pneg %p42
    $region19: #{tpu_custom_call.1} parent=1 // pred_check_branch
      %45 = sbr.rel (%p43) target = $region21
    $region20: #{tpu_custom_call.1} parent=1 // pred_region
      %46 = vst [vmem:[#allocation2] sm:$0xff] 0.0
    $region21: #{tpu_custom_call.1} parent=1 // pred_fallthru
      _
    %v47 = vld [vmem:[#allocation3] sm:$0xff]
    %v48 = vld [vmem:[#allocation3 + $0x8] sm:$0xff]
    %v49 = vld [vmem:[#allocation3 + $0x10] sm:$0xff]
    %v50 = vld [vmem:[#allocation3 + $0x18] sm:$0xff]
    %v51 = vld [vmem:[#allocation6] sm:$0xff]
    %v52 = vld [vmem:[#allocation2] sm:$0xff]
    %vm53 = vcmask 261120
    %v55 = vsel %vm53, %v51, 0
    %57 = vmatpush.msra.mxu0 0.0
    %58 = vmatpush.msra.mxu0 0.0
    %59 = vmatpush.msra.mxu0 0.0
    %60 = vmatpush.msra.mxu0 0.0
    %61 = vmatpush.msra.mxu0 0.0
    %62 = vmatpush.msra.mxu0 0.0
    %63 = vmatpush.msra.mxu0 0.0
    %64 = vmatpush.msra.mxu0 0.0
    %65 = vmatpush.msra.mxu0 0.0
    %66 = vmatpush.msra.mxu0 0.0
    %67 = vmatpush.msra.mxu0 0.0
    %68 = vmatpush.msra.mxu0 0.0
    %69 = vmatpush.msra.mxu0 %v50
    %70 = vmatpush.msra.mxu0 %v49
    %71 = vmatpush.msra.mxu0 %v48
    %72 = vmatpush.msra.mxu0 %v47
    %73 = vmatmul.f32.gmra.mxu0 %v55
    %v74 = vpop.f32.mrf.mxu0
    %v75 = vadd.f32 0.0, %v74
    %76 = vdwg.mxu0
    %v77 = vadd.f32 %v52, %v75
    %78 = vst [vmem:[#allocation2] sm:$0xff] %v77
    // Predicated region
    $region22: #{tpu_custom_call.1} parent=1 // pred_check
      %p79 = pneg %p42
    $region23: #{tpu_custom_call.1} parent=1 // pred_check_branch
      %81 = sbr.rel (%p79) target = $region25
    $region24: #{tpu_custom_call.1} parent=1 // pred_region
      %v82 = vld [vmem:[#allocation2] sm:$0xff]
      %83 = vst [vmem:[#allocation8] sm:$0xff] %v82
    $region25: #{tpu_custom_call.1} parent=1 // pred_fallthru
      _
    // Predicated region
    $region26: #{tpu_custom_call.1} parent=1 // pred_check
      _
    $region27: #{tpu_custom_call.1} parent=1 // pred_check_branch
      %85 = sbr.rel (0) target = $region29
    $region28: #{tpu_custom_call.1} parent=1 // pred_region
      %87 = vsyncadd [#allocation5], 0
      %s89 = sshll.u32 [#allocation8], 4
      %s90 = int_to_ptr.vmem [resolvable:$true] %s89
      %s91 = sshll.u32 %s2, 4
      %s92 = int_to_ptr.hbm [resolvable:$true] %s91
      %94 = dma.vmem_to_hbm [thread:$0]  %s90, 128, %s92, [#allocation5]
    $region29: #{tpu_custom_call.1} parent=1 // pred_fallthru
      _
    // Predicated region
    $region30: #{tpu_custom_call.1} parent=1 // pred_check
      _
    $region31: #{tpu_custom_call.1} parent=1 // pred_check_branch
      %96 = sbr.rel (0) target = $region33
    $region32: #{tpu_custom_call.1} parent=1 // pred_region
      %98 = dma.done [#allocation5], 128
    $region33: #{tpu_custom_call.1} parent=1 // pred_fallthru
      _
    %99 = vsyncpa [#allocation4], 1
    %100 = vsyncpa [#allocation7], 1
    %101 = vsyncpa [#allocation5], 1

</llo_original>
